<compile_context>
chip_gen: v7x
topology: tpu7x:2x2x1
jax: 0.10.0
libtpu: 0.0.40
codegen_flags: <defaults>
</compile_context>

<pallas_src>
import jax
import jax.numpy as jnp
from jax.experimental import pallas as pl
from jax.experimental.pallas import tpu as pltpu

_EPS = 1e-5


def _make_kernel(co: int, t: int, t_out: int, use_roll: bool):
    def kernel(x_ref, dconv_ref, lin_ref, o_ref):
        # x_ref:     (1, 2, F_blk, T)      VMEM
        # dconv_ref: (6,)                  SMEM  [wr0,wr1,wr2, wi0,wi1,wi2]
        # lin_ref:   (3*Co,)               SMEM  [A[0..Co) | B[0..Co) | C[0..Co)]
        # o_ref:     (1, Co, F_blk, T-2)   VMEM
        real = x_ref[0, 0].astype(jnp.float32)            # (F_blk, T)
        imag = x_ref[0, 1].astype(jnp.float32)

        wr0, wr1, wr2 = dconv_ref[0], dconv_ref[1], dconv_ref[2]
        wi0, wi1, wi2 = dconv_ref[3], dconv_ref[4], dconv_ref[5]

        if use_roll:
            # Full-width left-shifts on the XLU.  pltpu.roll follows jnp.roll
            # semantics (out[j] = in[(j - shift) % T]) so shift = T-k gives
            # out[j] = in[j + k].  Data stays lane-tile aligned; the wrapped
            # tail columns (j >= t_out) are sliced away once, after the conv.
            r0, i0 = real, imag
            r1 = pltpu.roll(real, shift=t - 1, axis=1)
            r2 = pltpu.roll(real, shift=t - 2, axis=1)
            i1 = pltpu.roll(imag, shift=t - 1, axis=1)
            i2 = pltpu.roll(imag, shift=t - 2, axis=1)
        else:
            # Small / non-128-aligned T: the 1-2 element shifts stay inside a
            # single vreg, plain slices are cheap here.
            r0 = real[:, 0:t_out]
            r1 = real[:, 1:t_out + 1]
            r2 = real[:, 2:t_out + 2]
            i0 = imag[:, 0:t_out]
            i1 = imag[:, 1:t_out + 1]
            i2 = imag[:, 2:t_out + 2]

        # Bias-free 1x3 complex conv (conv biases are folded into C).
        dc_r = wr0 * r0 + wr1 * r1 + wr2 * r2 - wi0 * i0 - wi1 * i1 - wi2 * i2
        dc_i = wi0 * r0 + wi1 * r1 + wi2 * r2 + wr0 * i0 + wr1 * i1 + wr2 * i2
        if use_roll:
            dc_r = dc_r[:, 0:t_out]   # aligned prefix slice, done once
            dc_i = dc_i[:, 0:t_out]

        # Hoist all per-channel SMEM coefficient reads ahead of the store loop.
        # TODO(synk): for co >~ 16 switch to lax.fori_loop(..., unroll=True) with
        #             a dynamic channel index (or an MXU (co,3) contraction) to
        #             keep code size / vreg live ranges flat.
        coeff = [(lin_ref[o], lin_ref[co + o], lin_ref[2 * co + o])
                 for o in range(co)]
        for o in range(co):
            a, b, c = coeff[o]
            o_ref[0, o, :, :] = (a * dc_r + b * dc_i + c).astype(o_ref.dtype)

    return kernel


def _fold_params(params, eps=_EPS):
    """Fold conv biases + BN(eval) + complex 1x1 + cplx2real into (A, B, C)."""
    f32 = jnp.float32
    co = params["pw_r"].shape[0]
    wr = params["dw_r"].astype(f32).reshape(3)
    wi = params["dw_i"].astype(f32).reshape(3)
    br = params["db_r"].astype(f32).reshape(())
    bi = params["db_i"].astype(f32).reshape(())
    dconv = jnp.concatenate([wr, wi])                      # (6,)
    # Eval-mode BatchNorm as per-channel scale/shift (channels: 0=re, 1=im).
    s = params["bn_g"].astype(f32) / jnp.sqrt(params["bn_v"].astype(f32) + eps)
    t = params["bn_b"].astype(f32) - params["bn_m"].astype(f32) * s
    # cplx2real weight split over the [real | imag] concat of the point conv.
    wc_r = params["cw"][:, :co].astype(f32)
    wc_i = params["cw"][:, co:].astype(f32)
    pw_r, pw_i = params["pw_r"].astype(f32), params["pw_i"].astype(f32)
    pb_r, pb_i = params["pb_r"].astype(f32), params["pb_i"].astype(f32)
    A = wc_r @ pw_r + wc_i @ pw_i                          # coeff on bn_real
    B = -wc_r @ pw_i + wc_i @ pw_r                         # coeff on bn_imag
    C = wc_r @ (pb_r - pb_i) + wc_i @ (pb_r + pb_i) + params["cb"].astype(f32)
    # Fold BN and the 1x3-conv biases so the kernel acts on the bias-free conv.
    A_f = A * s[0]
    B_f = B * s[1]
    C_f = C + A * t[0] + B * t[1] + A_f * (br - bi) + B_f * (br + bi)
    lin = jnp.concatenate([A_f, B_f, C_f]).astype(f32)     # (3*Co,)
    return dconv, lin


def _pick_vmem_limit_bytes() -> int:
    """Generation-gated scoped-VMEM request (v5e/v6e: 128 MiB physical VMEM per
    core -> ask for 64 MiB; v7x: only 64 MiB physical -> stay at 48 MiB)."""
    try:
        phys = int(pltpu.get_tpu_info().vmem_capacity_bytes)
    except Exception:           # query unavailable -> most conservative (v7x)
        phys = 64 << 20
    return (64 << 20) if phys >= (100 << 20) else (48 << 20)


def phase_encoder_v3(x, params, *, eps=_EPS, f_block=None):
    """PhaseEncoderV3.forward (inference). x: [B, 2, F, T] -> [B, Co, F, T-2]."""
    B, C, Fdim, T = x.shape
    assert C == 2, "kernel implements the module default in_channels=1 (C = re/im)"
    # TODO(synk): in_channels > 1 (channel-mixing 1x3 depth conv) not implemented.
    # TODO(synk): BatchNorm is eval-mode (running stats); train-mode batch stats
    #             would need a reduction pass over (B, F, T-2).
    assert T >= 3
    co = int(params["pw_r"].shape[0])
    t_out = T - 2

    dconv, lin = _fold_params(params, eps)

    vmem_limit = _pick_vmem_limit_bytes()
    if f_block is None:
        # Per-step VMEM footprint per F row: double-buffered input+output blocks
        # plus the f32 working set (real/imag, shifted copies, dc_r/dc_i, store
        # staging).  Deliberate over-estimate, sized against ~75% of the scoped
        # VMEM limit.  Applied unconditionally (no small-F escape hatch).
        itemsize = x.dtype.itemsize
        io_row = 2 * (2 * T + co * t_out) * itemsize       # x2 = double buffer
        tmp_row = (6 * T + 3 * t_out) * 4                  # f32 temporaries
        per_row = io_row + tmp_row
        budget = (vmem_limit * 3) // 4
        f_blk = (budget // per_row) // 8 * 8
        f_blk = max(8, f_blk)
        f_blk = min(Fdim, f_blk)
        # TODO(synk): if F is tiny while T*co is huge this can still exceed the
        #             budget; that would need T tiling with a 2-column halo.
        # v7x megacore: "parallel" grid axes shard across the 2 TensorCores, so
        # guarantee >= 2 grid steps (costs only ~0.35us extra on v5e/v6e).
        if B * pl.cdiv(Fdim, f_blk) < 2 and Fdim >= 16:
            f_blk = (((Fdim + 1) // 2) + 7) // 8 * 8
    else:
        f_blk = int(f_block)

    grid = (B, pl.cdiv(Fdim, f_blk))
    # Rolls only pay off (and lower most robustly) when the lane dim is a
    # multiple of 128; otherwise the 1-2 lane shifts stay inside one vreg.
    use_roll = (T % 128 == 0)

    # NOTE: when Fdim % f_blk != 0 the last F block reads Pallas-padded rows;
    # their results are discarded on writeback (nothing reduces over them).
    # TODO(synk): further levers not exercised here: bf16 VPU fast path on
    #             v6e/v7x, pl.Buffered(3) on v7x, and a lane-dense F-major
    #             layout for deployments with small T (<~128).
    return pl.pallas_call(
        _make_kernel(co, T, t_out, use_roll),
        out_shape=jax.ShapeDtypeStruct((B, co, Fdim, t_out), x.dtype),
        grid=grid,
        in_specs=[
            pl.BlockSpec((1, 2, f_blk, T), lambda b, f: (b, 0, f, 0)),
            pl.BlockSpec(memory_space=pltpu.MemorySpace.SMEM),
            pl.BlockSpec(memory_space=pltpu.MemorySpace.SMEM),
        ],
        out_specs=pl.BlockSpec((1, co, f_blk, t_out), lambda b, f: (b, 0, f, 0)),
        compiler_params=pltpu.CompilerParams(
            dimension_semantics=("parallel", "parallel"),
            vmem_limit_bytes=int(vmem_limit),
        ),
    )(x, dconv, lin)


def _ref_forward(x, params, eps=_EPS):
    """Pure-JAX reference, unfolded, mirroring the PyTorch forward (eval BN)."""
    real, imag = x[:, 0].astype(jnp.float32), x[:, 1].astype(jnp.float32)
    wr, wi = params["dw_r"].reshape(3), params["dw_i"].reshape(3)
    br, bi = params["db_r"].reshape(()), params["db_i"].reshape(())

    def conv1x3(u, w):
        return w[0] * u[..., 0:-2] + w[1] * u[..., 1:-1] + w[2] * u[..., 2:]

    rr = conv1x3(real, wr) + br
    ii = conv1x3(imag, wi) + bi
    ri = conv1x3(real, wi) + bi
    ir = conv1x3(imag, wr) + br
    d_real, d_imag = rr - ii, ri + ir
    g, b_, m, v = params["bn_g"], params["bn_b"], params["bn_m"], params["bn_v"]
    bn_r = (d_real - m[0]) / jnp.sqrt(v[0] + eps) * g[0] + b_[0]
    bn_i = (d_imag - m[1]) / jnp.sqrt(v[1] + eps) * g[1] + b_[1]
    wpr, wpi = params["pw_r"], params["pw_i"]
    bpr, bpi = params["pb_r"], params["pb_i"]
    e = lambda w: w[None, :, None, None]
    p_real = (e(wpr) * bn_r[:, None] + e(bpr)) - (e(wpi) * bn_i[:, None] + e(bpi))
    p_imag = (e(wpi) * bn_r[:, None] + e(bpi)) + (e(wpr) * bn_i[:, None] + e(bpr))
    pc = jnp.concatenate([p_real, p_imag], axis=1)
    out = jnp.einsum("oc,bcft->boft", params["cw"], pc) + e(params["cb"])
    return out.astype(x.dtype)


if __name__ == "__main__":
    key = jax.random.PRNGKey(0)
    keys = jax.random.split(key, 16)
    B, Fdim, T, Co = 2, 16, 16, 4          # X: [B, 2, F, T], out_channels = 4

    x = jax.random.normal(keys[0], (B, 2, Fdim, T), dtype=jnp.float32)
    params = dict(
        # ComplexConv2d(1, 1, (1,3)) — non-zero biases to exercise the fold
        dw_r=(0.05 * jax.random.normal(keys[1], (3,))).astype(jnp.float32),
        dw_i=(0.05 * jax.random.normal(keys[2], (3,))).astype(jnp.float32),
        db_r=(0.02 * jax.random.normal(keys[3], ())).astype(jnp.float32),
        db_i=(0.02 * jax.random.normal(keys[4], ())).astype(jnp.float32),
        # BatchNorm2d(2) eval-mode params / running stats
        bn_g=(1.0 + 0.1 * jax.random.normal(keys[5], (2,))).astype(jnp.float32),
        bn_b=(0.05 * jax.random.normal(keys[6], (2,))).astype(jnp.float32),
        bn_m=(0.1 * jax.random.normal(keys[7], (2,))).astype(jnp.float32),
        bn_v=(jnp.abs(jax.random.normal(keys[8], (2,))) + 0.5).astype(jnp.float32),
        # ComplexConv2d(1, Co, (1,1))
        pw_r=(0.05 * jax.random.normal(keys[9], (Co,))).astype(jnp.float32),
        pw_i=(0.05 * jax.random.normal(keys[10], (Co,))).astype(jnp.float32),
        pb_r=(0.02 * jax.random.normal(keys[11], (Co,))).astype(jnp.float32),
        pb_i=(0.02 * jax.random.normal(keys[12], (Co,))).astype(jnp.float32),
        # cplx2real: Conv2d(2*Co, Co, 1)
        cw=(0.1 * jax.random.normal(keys[13], (Co, 2 * Co))).astype(jnp.float32),
        cb=(0.02 * jax.random.normal(keys[14], (Co,))).astype(jnp.float32),
    )

    fwd = jax.jit(phase_encoder_v3)
    y = fwd(x, params)
    jax.block_until_ready(y)
    y_ref = _ref_forward(x, params)
    assert y.shape == (B, Co, Fdim, T - 2) and y.dtype == x.dtype
    err = float(jnp.max(jnp.abs(y - y_ref)))
    assert jnp.allclose(y, y_ref, rtol=1e-4, atol=1e-5), err

    # Second config: F not a multiple of the block -> multi-block grid whose
    # last, padded F block is computed and discarded on writeback.
    x2 = jax.random.normal(keys[15], (1, 2, 20, T), dtype=jnp.float32)
    fwd2 = jax.jit(lambda a, p: phase_encoder_v3(a, p, f_block=8))
    y2 = fwd2(x2, params)
    jax.block_until_ready(y2)
    y2_ref = _ref_forward(x2, params)
    err2 = float(jnp.max(jnp.abs(y2 - y2_ref)))
    assert y2.shape == (1, Co, 20, T - 2)
    assert jnp.allclose(y2, y2_ref, rtol=1e-4, atol=1e-5), err2

    print("KERNEL_OK")
</pallas_src>

<mosaic_0001>
module attributes {stable_mosaic.version = 11 : i64} {
  func.func @kernel(%arg0: i32, %arg1: i32, %arg2: memref<1x2x16x16xf32, #tpu.memory_space<vmem>>, %arg3: memref<6xf32, #tpu.memory_space<smem>>, %arg4: memref<12xf32, #tpu.memory_space<smem>>, %arg5: memref<1x4x16x14xf32, #tpu.memory_space<vmem>>) attributes {dimension_semantics = [#tpu.dimension_semantics<parallel>, #tpu.dimension_semantics<parallel>], iteration_bounds = array<i64: 2, 1>, scalar_prefetch = 0 : i64, scratch_operands = 0 : i64, tpu.core_type = #tpu.core_type<tc>, window_params = [{transform_indices = @transform_0, window_bounds = array<i64: 1, 2, 16, 16>}, {transform_indices = @transform_1, window_bounds = array<i64: 6>}, {transform_indices = @transform_2, window_bounds = array<i64: 12>}, {transform_indices = @transform_3, window_bounds = array<i64: 1, 4, 16, 14>}]} {
    %c0 = arith.constant 0 : index
    %c0_0 = arith.constant 0 : index
    %c0_1 = arith.constant 0 : index
    %c0_2 = arith.constant 0 : index
    %0 = vector.load %arg2[%c0, %c0_0, %c0_1, %c0_2] : memref<1x2x16x16xf32, #tpu.memory_space<vmem>>, vector<1x1x16x16xf32>
    %1 = vector.shape_cast %0 : vector<1x1x16x16xf32> to vector<16x16xf32>
    %c0_3 = arith.constant 0 : index
    %c1 = arith.constant 1 : index
    %c0_4 = arith.constant 0 : index
    %c0_5 = arith.constant 0 : index
    %2 = vector.load %arg2[%c0_3, %c1, %c0_4, %c0_5] : memref<1x2x16x16xf32, #tpu.memory_space<vmem>>, vector<1x1x16x16xf32>
    %3 = vector.shape_cast %2 : vector<1x1x16x16xf32> to vector<16x16xf32>
    %c0_6 = arith.constant 0 : index
    %4 = memref.load %arg3[%c0_6] : memref<6xf32, #tpu.memory_space<smem>>
    %c1_7 = arith.constant 1 : index
    %5 = memref.load %arg3[%c1_7] : memref<6xf32, #tpu.memory_space<smem>>
    %c2 = arith.constant 2 : index
    %6 = memref.load %arg3[%c2] : memref<6xf32, #tpu.memory_space<smem>>
    %c3 = arith.constant 3 : index
    %7 = memref.load %arg3[%c3] : memref<6xf32, #tpu.memory_space<smem>>
    %c4 = arith.constant 4 : index
    %8 = memref.load %arg3[%c4] : memref<6xf32, #tpu.memory_space<smem>>
    %c5 = arith.constant 5 : index
    %9 = memref.load %arg3[%c5] : memref<6xf32, #tpu.memory_space<smem>>
    %10 = vector.extract_strided_slice %1 {offsets = [0, 0], sizes = [16, 14], strides = [1, 1]} : vector<16x16xf32> to vector<16x14xf32>
    %11 = vector.extract_strided_slice %1 {offsets = [0, 1], sizes = [16, 14], strides = [1, 1]} : vector<16x16xf32> to vector<16x14xf32>
    %12 = vector.extract_strided_slice %1 {offsets = [0, 2], sizes = [16, 14], strides = [1, 1]} : vector<16x16xf32> to vector<16x14xf32>
    %13 = vector.extract_strided_slice %3 {offsets = [0, 0], sizes = [16, 14], strides = [1, 1]} : vector<16x16xf32> to vector<16x14xf32>
    %14 = vector.extract_strided_slice %3 {offsets = [0, 1], sizes = [16, 14], strides = [1, 1]} : vector<16x16xf32> to vector<16x14xf32>
    %15 = vector.extract_strided_slice %3 {offsets = [0, 2], sizes = [16, 14], strides = [1, 1]} : vector<16x16xf32> to vector<16x14xf32>
    %16 = vector.broadcast %4 : f32 to vector<16x14xf32>
    %17 = arith.mulf %16, %10 : vector<16x14xf32>
    %18 = vector.broadcast %5 : f32 to vector<16x14xf32>
    %19 = arith.mulf %18, %11 : vector<16x14xf32>
    %20 = arith.addf %17, %19 : vector<16x14xf32>
    %21 = vector.broadcast %6 : f32 to vector<16x14xf32>
    %22 = arith.mulf %21, %12 : vector<16x14xf32>
    %23 = arith.addf %20, %22 : vector<16x14xf32>
    %24 = vector.broadcast %7 : f32 to vector<16x14xf32>
    %25 = arith.mulf %24, %13 : vector<16x14xf32>
    %26 = arith.subf %23, %25 : vector<16x14xf32>
    %27 = vector.broadcast %8 : f32 to vector<16x14xf32>
    %28 = arith.mulf %27, %14 : vector<16x14xf32>
    %29 = arith.subf %26, %28 : vector<16x14xf32>
    %30 = vector.broadcast %9 : f32 to vector<16x14xf32>
    %31 = arith.mulf %30, %15 : vector<16x14xf32>
    %32 = arith.subf %29, %31 : vector<16x14xf32>
    %33 = vector.broadcast %7 : f32 to vector<16x14xf32>
    %34 = arith.mulf %33, %10 : vector<16x14xf32>
    %35 = vector.broadcast %8 : f32 to vector<16x14xf32>
    %36 = arith.mulf %35, %11 : vector<16x14xf32>
    %37 = arith.addf %34, %36 : vector<16x14xf32>
    %38 = vector.broadcast %9 : f32 to vector<16x14xf32>
    %39 = arith.mulf %38, %12 : vector<16x14xf32>
    %40 = arith.addf %37, %39 : vector<16x14xf32>
    %41 = vector.broadcast %4 : f32 to vector<16x14xf32>
    %42 = arith.mulf %41, %13 : vector<16x14xf32>
    %43 = arith.addf %40, %42 : vector<16x14xf32>
    %44 = vector.broadcast %5 : f32 to vector<16x14xf32>
    %45 = arith.mulf %44, %14 : vector<16x14xf32>
    %46 = arith.addf %43, %45 : vector<16x14xf32>
    %47 = vector.broadcast %6 : f32 to vector<16x14xf32>
    %48 = arith.mulf %47, %15 : vector<16x14xf32>
    %49 = arith.addf %46, %48 : vector<16x14xf32>
    %c0_8 = arith.constant 0 : index
    %50 = memref.load %arg4[%c0_8] : memref<12xf32, #tpu.memory_space<smem>>
    %c4_9 = arith.constant 4 : index
    %51 = memref.load %arg4[%c4_9] : memref<12xf32, #tpu.memory_space<smem>>
    %c8 = arith.constant 8 : index
    %52 = memref.load %arg4[%c8] : memref<12xf32, #tpu.memory_space<smem>>
    %c1_10 = arith.constant 1 : index
    %53 = memref.load %arg4[%c1_10] : memref<12xf32, #tpu.memory_space<smem>>
    %c5_11 = arith.constant 5 : index
    %54 = memref.load %arg4[%c5_11] : memref<12xf32, #tpu.memory_space<smem>>
    %c9 = arith.constant 9 : index
    %55 = memref.load %arg4[%c9] : memref<12xf32, #tpu.memory_space<smem>>
    %c2_12 = arith.constant 2 : index
    %56 = memref.load %arg4[%c2_12] : memref<12xf32, #tpu.memory_space<smem>>
    %c6 = arith.constant 6 : index
    %57 = memref.load %arg4[%c6] : memref<12xf32, #tpu.memory_space<smem>>
    %c10 = arith.constant 10 : index
    %58 = memref.load %arg4[%c10] : memref<12xf32, #tpu.memory_space<smem>>
    %c3_13 = arith.constant 3 : index
    %59 = memref.load %arg4[%c3_13] : memref<12xf32, #tpu.memory_space<smem>>
    %c7 = arith.constant 7 : index
    %60 = memref.load %arg4[%c7] : memref<12xf32, #tpu.memory_space<smem>>
    %c11 = arith.constant 11 : index
    %61 = memref.load %arg4[%c11] : memref<12xf32, #tpu.memory_space<smem>>
    %62 = vector.broadcast %50 : f32 to vector<16x14xf32>
    %63 = arith.mulf %62, %32 : vector<16x14xf32>
    %64 = vector.broadcast %51 : f32 to vector<16x14xf32>
    %65 = arith.mulf %64, %49 : vector<16x14xf32>
    %66 = arith.addf %63, %65 : vector<16x14xf32>
    %67 = vector.broadcast %52 : f32 to vector<16x14xf32>
    %68 = arith.addf %66, %67 : vector<16x14xf32>
    %c0_14 = arith.constant 0 : index
    %c0_15 = arith.constant 0 : index
    %c0_16 = arith.constant 0 : index
    %c0_17 = arith.constant 0 : index
    %69 = vector.load %arg5[%c0_14, %c0_15, %c0_16, %c0_17] : memref<1x4x16x14xf32, #tpu.memory_space<vmem>>, vector<1x1x16x14xf32>
    %70 = vector.shape_cast %69 : vector<1x1x16x14xf32> to vector<16x14xf32>
    %71 = vector.shape_cast %68 : vector<16x14xf32> to vector<1x1x16x14xf32>
    tpu.vector_store %arg5[%c0_14, %c0_15, %c0_16, %c0_17], %71 {strides = array<i32>} : memref<1x4x16x14xf32, #tpu.memory_space<vmem>>, vector<1x1x16x14xf32>,
    %72 = vector.broadcast %53 : f32 to vector<16x14xf32>
    %73 = arith.mulf %72, %32 : vector<16x14xf32>
    %74 = vector.broadcast %54 : f32 to vector<16x14xf32>
    %75 = arith.mulf %74, %49 : vector<16x14xf32>
    %76 = arith.addf %73, %75 : vector<16x14xf32>
    %77 = vector.broadcast %55 : f32 to vector<16x14xf32>
    %78 = arith.addf %76, %77 : vector<16x14xf32>
    %c0_18 = arith.constant 0 : index
    %c1_19 = arith.constant 1 : index
    %c0_20 = arith.constant 0 : index
    %c0_21 = arith.constant 0 : index
    %79 = vector.load %arg5[%c0_18, %c1_19, %c0_20, %c0_21] : memref<1x4x16x14xf32, #tpu.memory_space<vmem>>, vector<1x1x16x14xf32>
    %80 = vector.shape_cast %79 : vector<1x1x16x14xf32> to vector<16x14xf32>
    %81 = vector.shape_cast %78 : vector<16x14xf32> to vector<1x1x16x14xf32>
    tpu.vector_store %arg5[%c0_18, %c1_19, %c0_20, %c0_21], %81 {strides = array<i32>} : memref<1x4x16x14xf32, #tpu.memory_space<vmem>>, vector<1x1x16x14xf32>,
    %82 = vector.broadcast %56 : f32 to vector<16x14xf32>
    %83 = arith.mulf %82, %32 : vector<16x14xf32>
    %84 = vector.broadcast %57 : f32 to vector<16x14xf32>
    %85 = arith.mulf %84, %49 : vector<16x14xf32>
    %86 = arith.addf %83, %85 : vector<16x14xf32>
    %87 = vector.broadcast %58 : f32 to vector<16x14xf32>
    %88 = arith.addf %86, %87 : vector<16x14xf32>
    %c0_22 = arith.constant 0 : index
    %c2_23 = arith.constant 2 : index
    %c0_24 = arith.constant 0 : index
    %c0_25 = arith.constant 0 : index
    %89 = vector.load %arg5[%c0_22, %c2_23, %c0_24, %c0_25] : memref<1x4x16x14xf32, #tpu.memory_space<vmem>>, vector<1x1x16x14xf32>
    %90 = vector.shape_cast %89 : vector<1x1x16x14xf32> to vector<16x14xf32>
    %91 = vector.shape_cast %88 : vector<16x14xf32> to vector<1x1x16x14xf32>
    tpu.vector_store %arg5[%c0_22, %c2_23, %c0_24, %c0_25], %91 {strides = array<i32>} : memref<1x4x16x14xf32, #tpu.memory_space<vmem>>, vector<1x1x16x14xf32>,
    %92 = vector.broadcast %59 : f32 to vector<16x14xf32>
    %93 = arith.mulf %92, %32 : vector<16x14xf32>
    %94 = vector.broadcast %60 : f32 to vector<16x14xf32>
    %95 = arith.mulf %94, %49 : vector<16x14xf32>
    %96 = arith.addf %93, %95 : vector<16x14xf32>
    %97 = vector.broadcast %61 : f32 to vector<16x14xf32>
    %98 = arith.addf %96, %97 : vector<16x14xf32>
    %c0_26 = arith.constant 0 : index
    %c3_27 = arith.constant 3 : index
    %c0_28 = arith.constant 0 : index
    %c0_29 = arith.constant 0 : index
    %99 = vector.load %arg5[%c0_26, %c3_27, %c0_28, %c0_29] : memref<1x4x16x14xf32, #tpu.memory_space<vmem>>, vector<1x1x16x14xf32>
    %100 = vector.shape_cast %99 : vector<1x1x16x14xf32> to vector<16x14xf32>
    %101 = vector.shape_cast %98 : vector<16x14xf32> to vector<1x1x16x14xf32>
    tpu.vector_store %arg5[%c0_26, %c3_27, %c0_28, %c0_29], %101 {strides = array<i32>} : memref<1x4x16x14xf32, #tpu.memory_space<vmem>>, vector<1x1x16x14xf32>,
    return
  }
  func.func @transform_0(%arg0: i32, %arg1: i32) -> (i32, i32, i32, i32) {
    %c0_i32 = arith.constant 0 : i32
    %c0_i32_0 = arith.constant 0 : i32
    %c0_i32_1 = arith.constant 0 : i32
    return %arg0, %c0_i32, %arg1, %c0_i32_0 : i32, i32, i32, i32
  }
  func.func @transform_1(%arg0: i32, %arg1: i32) -> i32 {
    %c0_i32 = arith.constant 0 : i32
    %c0_i32_0 = arith.constant 0 : i32
    return %c0_i32 : i32
  }
  func.func @transform_2(%arg0: i32, %arg1: i32) -> i32 {
    %c0_i32 = arith.constant 0 : i32
    %c0_i32_0 = arith.constant 0 : i32
    return %c0_i32 : i32
  }
  func.func @transform_3(%arg0: i32, %arg1: i32) -> (i32, i32, i32, i32) {
    %c0_i32 = arith.constant 0 : i32
    %c0_i32_0 = arith.constant 0 : i32
    %c0_i32_1 = arith.constant 0 : i32
    return %arg0, %c0_i32, %arg1, %c0_i32_0 : i32, i32, i32, i32
  }
}

</mosaic_0001>

<llo_original>
// kernel: phase_encoder_v3.1
$region0: #{phase_encoder_v3.1}
  #allocation0 [shape = 'u32[]', space=smem, size = 0x4, offset = 0x4, fixed_abs, tag = 'smem constant byte address 0x4 - core index']
  #allocation1 [shape = 'u32[144,128]{1,0:T(1,128)}', space=vmem, size = 0x12000, scoped, tag = 'internal scratch']
  %s0 = inlined_call_operand.vmem [shape: f32[2,2,16,16], index: 0, kind: input, shape index: {}]
  %s1 = inlined_call_operand.vmem [shape: f32[6], index: 1, kind: input, shape index: {}]
  %s2 = inlined_call_operand.vmem [shape: f32[12], index: 2, kind: input, shape index: {}]
  %s3 = inlined_call_operand.vmem [shape: f32[2,4,16,14], index: 3, kind: output, shape index: {}]
  %s4 = sld [smem:[#allocation0]]
  $region53: #{phase_encoder_v3.1} parent=0
    _
  %s6 = ssub.s32 1, %s4
  %s7 = scalar_select 0, %s6, %s4
  $region1: #{phase_encoder_v3.1} parent=0
    #allocation2 [shape = 'u8[512]{0}', space=smem, size = 0x200, scoped, tag = 'input window, operand 1, single buffered']
    #allocation3 [shape = 's32[2]{0}', space=sflag, size = 0x8, scoped, tag = 'scoped memory for phase_encoder_v3.1']
    #allocation4 [shape = 'u8[512]{0}', space=smem, size = 0x200, scoped, tag = 'input window, operand 2, single buffered']
    #allocation5 [shape = 's32[1]{0}', space=sflag, size = 0x4, scoped, tag = 'scoped memory for phase_encoder_v3.1']
    %8 = vsyncpa [#allocation3], 0
    %9 = vsyncpa [#allocation5], 0
    loop: start=0, step=1, limit=4
    $region2: #{phase_encoder_v3.1} parent=1 // loop_pre_header
      _
    $region3: #{phase_encoder_v3.1} parent=1 // loop_header
      %s11 = sphi 0, %s15
      %p12 = scmp.ge.s32.totalorder %s11, 4
      %s18 = sphi 0, %s30
      %s19 = sphi 0, %s26
      %s20 = sphi 0, %s18
      %s21 = sphi 0, %s19
      %s22 = sphi 0, %s20
      %s23 = sphi 0, %s21
      %s35 = sphi 0, %s37
      %s38 = sphi 0, %s35
      %s39 = sphi 0, %s38
      %s55 = sphi 0, %s39
      %s59 = sphi 0, %s59
      %s61 = sphi 0, %s59
      %s62 = sphi 0, %s61
      %s76 = sphi 0, %s62
      %s80 = sphi 0, %s80
      %s82 = sphi 0, %s80
      %s83 = sphi 0, %s82
      %s97 = sphi 0, %s83
      %s105 = sphi 0, %s107
      %s108 = sphi 0, %s105
      %s109 = sphi 0, %s108
      %s125 = sphi 0, %s109
    $region4: #{phase_encoder_v3.1} parent=1 // loop_header_branch
      %14 = sbr.rel (%p12) target = $region8
    $region5: #{phase_encoder_v3.1} parent=1 // loop_body
      %s16 = ssub.s32 %s11, 1
      %s17 = ssub.s32 %s11, 2
      %s24 = sadd.s32 1, %s19
      %p25 = scmp.ge.s32.totalorder %s24, 1
      %s26 = scalar_select %p25, 0, %s24
      %s27 = sadd.s32 1, %s18
      %s28 = scalar_select %p25, %s27, %s18
      %p29 = scmp.ge.s32.totalorder %s28, 2
      %s30 = scalar_select %p29, 0, %s28
      %s31 = ssub.s32 %s18, %s30
      %s32 = ssub.s32 %s19, %s26
      %s33 = sor.u32 %s31, %s32
      %p34 = scmp.eq.s32.totalorder %s33, 0
      %s36 = sadd.s32 %s35, 1
      %s37 = scalar_select %p34, %s35, %s36
      %p40 = pneg %p34
      %p41 = scmp.eq.s32.totalorder %s11, 1
      %p42 = por %p40, %p41
      %p43 = scmp.ne.s32.totalorder %s35, %s38
      %p44 = scmp.eq.s32.totalorder %s11, 0
      %p45 = por %p43, %p44
      %p46 = scmp.ne.s32.totalorder %s35, %s38
      %p47 = scmp.eq.s32.totalorder %s16, 1
      %p48 = por %p46, %p47
      %p49 = scmp.ne.s32.totalorder %s38, %s39
      %p50 = scmp.eq.s32.totalorder %s16, 0
      %p51 = por %p49, %p50
      %p52 = scmp.ne.s32.totalorder %s38, %s39
      %p53 = scmp.eq.s32.totalorder %s17, 1
      %p54 = por %p52, %p53
      %p56 = scmp.ne.s32.totalorder %s39, %s55
      %p57 = scmp.eq.s32.totalorder %s17, 0
      %p58 = por %p56, %p57
      %s60 = sadd.s32 %s59, 1
      %p63 = scmp.eq.s32.totalorder %s11, 1
      %p64 = scmp.ne.s32.totalorder %s59, %s61
      %p65 = scmp.eq.s32.totalorder %s11, 0
      %p66 = por %p64, %p65
      %p67 = scmp.ne.s32.totalorder %s59, %s61
      %p68 = scmp.eq.s32.totalorder %s16, 1
      %p69 = por %p67, %p68
      %p70 = scmp.ne.s32.totalorder %s61, %s62
      %p71 = scmp.eq.s32.totalorder %s16, 0
      %p72 = por %p70, %p71
      %p73 = scmp.ne.s32.totalorder %s61, %s62
      %p74 = scmp.eq.s32.totalorder %s17, 1
      %p75 = por %p73, %p74
      %p77 = scmp.ne.s32.totalorder %s62, %s76
      %p78 = scmp.eq.s32.totalorder %s17, 0
      %p79 = por %p77, %p78
      %s81 = sadd.s32 %s80, 1
      %p84 = scmp.eq.s32.totalorder %s11, 1
      %p85 = scmp.ne.s32.totalorder %s80, %s82
      %p86 = scmp.eq.s32.totalorder %s11, 0
      %p87 = por %p85, %p86
      %p88 = scmp.ne.s32.totalorder %s80, %s82
      %p89 = scmp.eq.s32.totalorder %s16, 1
      %p90 = por %p88, %p89
      %p91 = scmp.ne.s32.totalorder %s82, %s83
      %p92 = scmp.eq.s32.totalorder %s16, 0
      %p93 = por %p91, %p92
      %p94 = scmp.ne.s32.totalorder %s82, %s83
      %p95 = scmp.eq.s32.totalorder %s17, 1
      %p96 = por %p94, %p95
      %p98 = scmp.ne.s32.totalorder %s83, %s97
      %p99 = scmp.eq.s32.totalorder %s17, 0
      %p100 = por %p98, %p99
      %s101 = ssub.s32 %s18, %s30
      %s102 = ssub.s32 %s19, %s26
      %s103 = sor.u32 %s101, %s102
      %p104 = scmp.eq.s32.totalorder %s103, 0
      %s106 = sadd.s32 %s105, 1
      %s107 = scalar_select %p104, %s105, %s106
      %p110 = pneg %p104
      %p111 = scmp.eq.s32.totalorder %s11, 1
      %p112 = por %p110, %p111
      %p113 = scmp.ne.s32.totalorder %s105, %s108
      %p114 = scmp.eq.s32.totalorder %s11, 0
      %p115 = por %p113, %p114
      %p116 = scmp.ne.s32.totalorder %s105, %s108
      %p117 = scmp.eq.s32.totalorder %s16, 1
      %p118 = por %p116, %p117
      %p119 = scmp.ne.s32.totalorder %s108, %s109
      %p120 = scmp.eq.s32.totalorder %s16, 0
      %p121 = por %p119, %p120
      %p122 = scmp.ne.s32.totalorder %s108, %s109
      %p123 = scmp.eq.s32.totalorder %s17, 1
      %p124 = por %p122, %p123
      %p126 = scmp.ne.s32.totalorder %s109, %s125
      %p127 = scmp.eq.s32.totalorder %s17, 0
      %p128 = por %p126, %p127
      %p129 = scmp.le.s32.totalorder 1, %s11
      %p130 = scmp.lt.s32.totalorder %s11, 3
      %p131 = pnand %p129, %p130
      %p132 = pneg %p131
      // Predicated region
      $region9: #{phase_encoder_v3.1} parent=5 // pred_check
        _
      $region10: #{phase_encoder_v3.1} parent=5 // pred_check_branch
        %134 = sbr.rel (%p131) target = $region12
      $region11: #{phase_encoder_v3.1} parent=5 // pred_region
        %s135 = ssub.s32 %s11, 1
        // Predicated region
        $region13: #{phase_encoder_v3.1} parent=11 // pred_check
          %p136 = pneg %p72
        $region14: #{phase_encoder_v3.1} parent=11 // pred_check_branch
          %138 = sbr.rel (%p136) target = $region16
        $region15: #{phase_encoder_v3.1} parent=11 // pred_region
          %s140 = ssub.s32 16, 16
          %141 = vsyncadd [#allocation3], %s140
          %s143 = sshll.u32 %s1, 4
          %s144 = int_to_ptr.vmem [resolvable:$true] %s143
          %146 = dma.vmem_to_smem %s144, 16, [#allocation2], [#allocation3]
        $region16: #{phase_encoder_v3.1} parent=11 // pred_fallthru
          _
        // Predicated region
        $region17: #{phase_encoder_v3.1} parent=11 // pred_check
          %p147 = pneg %p93
        $region18: #{phase_encoder_v3.1} parent=11 // pred_check_branch
          %149 = sbr.rel (%p147) target = $region20
        $region19: #{phase_encoder_v3.1} parent=11 // pred_region
          %s151 = ssub.s32 16, 16
          %152 = vsyncadd [#allocation5], %s151
          %s154 = sshll.u32 %s2, 4
          %s155 = int_to_ptr.vmem [resolvable:$true] %s154
          %157 = dma.vmem_to_smem %s155, 16, [#allocation4], [#allocation5]
        $region20: #{phase_encoder_v3.1} parent=11 // pred_fallthru
          _
      $region12: #{phase_encoder_v3.1} parent=5 // pred_fallthru
        _
      %p158 = scmp.lt.s32.totalorder %s11, 2
      // Predicated region
      $region21: #{phase_encoder_v3.1} parent=5 // pred_check
        %p159 = pneg %p158
      $region22: #{phase_encoder_v3.1} parent=5 // pred_check_branch
        %161 = sbr.rel (%p159) target = $region24
      $region23: #{phase_encoder_v3.1} parent=5 // pred_region
        // Predicated region
        $region25: #{phase_encoder_v3.1} parent=23 // pred_check
          %p162 = pneg %p45
        $region26: #{phase_encoder_v3.1} parent=23 // pred_check_branch
          %164 = sbr.rel (%p162) target = $region28
        $region27: #{phase_encoder_v3.1} parent=23 // pred_region
          %s165 = smul.u32 2, %s19
          %p166 = scmp.lt.s32.totalorder %s18, 1
          %s167 = scalar_select %p166, %s18, 1
          %p168 = scmp.lt.s32.totalorder %s165, 1
          %s169 = scalar_select %p168, %s165, 1
          %s170 = smul.addr %s167, 4
          %s171 = sadd.s32 %s169, %s170
          %s172 = smul.addr %s171, 8
          %s173 = scalar_lea.vmem %s0, %s172
          %s174 = smul.u32 2, %s19
        $region28: #{phase_encoder_v3.1} parent=23 // pred_fallthru
          _
      $region24: #{phase_encoder_v3.1} parent=5 // pred_fallthru
        _
      %p175 = scmp.le.s32.totalorder 1, %s11
      %p176 = scmp.lt.s32.totalorder %s11, 3
      %p177 = pnand %p175, %p176
      %p178 = pneg %p177
      // Predicated region
      $region29: #{phase_encoder_v3.1} parent=5 // pred_check
        _
      $region30: #{phase_encoder_v3.1} parent=5 // pred_check_branch
        %180 = sbr.rel (%p177) target = $region32
      $region31: #{phase_encoder_v3.1} parent=5 // pred_region
        %s181 = ssub.s32 %s11, 1
        // Predicated region
        $region33: #{phase_encoder_v3.1} parent=31 // pred_check
          %p182 = pneg %p72
        $region34: #{phase_encoder_v3.1} parent=31 // pred_check_branch
          %184 = sbr.rel (%p182) target = $region36
        $region35: #{phase_encoder_v3.1} parent=31 // pred_region
          %185 = dma.done [#allocation3], 16
        $region36: #{phase_encoder_v3.1} parent=31 // pred_fallthru
          _
        // Predicated region
        $region37: #{phase_encoder_v3.1} parent=31 // pred_check
          %p186 = pneg %p93
        $region38: #{phase_encoder_v3.1} parent=31 // pred_check_branch
          %188 = sbr.rel (%p186) target = $region40
        $region39: #{phase_encoder_v3.1} parent=31 // pred_region
          %189 = dma.done [#allocation5], 16
        $region40: #{phase_encoder_v3.1} parent=31 // pred_fallthru
          _
        %190 = sfence
        %s191 = smul.u32 2, %s21
        %p192 = scmp.lt.s32.totalorder %s20, 1
        %s193 = scalar_select %p192, %s20, 1
        %p194 = scmp.lt.s32.totalorder %s191, 1
        %s195 = scalar_select %p194, %s191, 1
        %s196 = smul.addr %s193, 4
        %s197 = sadd.s32 %s195, %s196
        %s198 = smul.addr %s197, 8
        %s199 = scalar_lea.vmem %s0, %s198
        %p200 = pneg %p51
        %p201 = pneg %p48
        %p202 = pneg %p72
        %p203 = pneg %p69
        %p204 = pneg %p93
        %p205 = pneg %p90
        %p206 = pneg %p121
        %p207 = pneg %p118
        %s208 = smul.u32 2, %s21
        %p209 = scmp.lt.s32.totalorder %s20, 1
        %s210 = scalar_select %p209, %s20, 1
        %p211 = scmp.lt.s32.totalorder %s208, 1
        %s212 = scalar_select %p211, %s208, 1
        %s213 = smul.addr %s210, 8
        %s214 = sadd.s32 %s212, %s213
        %s215 = smul.addr %s214, 8
        %s216 = scalar_lea.vmem %s3, %s215
        %s217 = smul.u32 2, %s21
        %p218 = scmp.lt.s32.totalorder %s20, 1
        %s219 = scalar_select %p218, %s20, 1
        %p220 = scmp.lt.s32.totalorder %s217, 1
        %s221 = scalar_select %p220, %s217, 1
        %s222 = smul.addr %s219, 4
        %s223 = sadd.s32 %s221, %s222
        %s224 = smul.addr %s223, 8
        %s225 = scalar_lea.vmem %s0, %s224
        %s226 = smul.u32 2, %s21
        %s227 = smul.u32 2, %s21
        %p228 = scmp.lt.s32.totalorder %s20, 1
        %s229 = scalar_select %p228, %s20, 1
        %p230 = scmp.lt.s32.totalorder %s227, 1
        %s231 = scalar_select %p230, %s227, 1
        %s232 = smul.addr %s229, 8
        %s233 = sadd.s32 %s231, %s232
        %s234 = smul.addr %s233, 8
        %s235 = scalar_lea.vmem %s3, %s234
        %s236 = smul.u32 2, %s21
        %v237 = vld [vmem:[%s225] sm:$0xff]
        %v238 = vld [vmem:[%s225 + $0x8] sm:$0xff]
        %s239 = scalar_lea.vmem %s225, 16
        %v240 = vld [vmem:[%s239] sm:$0xff]
        %v241 = vld [vmem:[%s239 + $0x8] sm:$0xff]
        %s242 = sld [smem:[#allocation2]]
        %s243 = sld [smem:[#allocation2 + $0x1]]
        %s244 = sld [smem:[#allocation2 + $0x2]]
        %s245 = sld [smem:[#allocation2 + $0x3]]
        %s246 = sld [smem:[#allocation2 + $0x4]]
        %s247 = sld [smem:[#allocation2 + $0x5]]
        %v248 = vstv %s242
        %v249 = vmul.f32 %v248, %v237
        %v250 = vmul.f32 %v248, %v238
        %v251 = vstv %s243
        %v252 = vmul.f32 %v251, %v237
        %v253 = vmul.f32 %v251, %v238
        %256 = vrot.lane.b32.xlu0 %v252, 127
        %v257 = vpop.permute.xlu0 %256
        %258 = vrot.lane.b32.xlu0 %v253, 127
        %v259 = vpop.permute.xlu0 %258
        %v262 = vadd.f32 %v249, %v257
        %v263 = vadd.f32 %v250, %v259
        %v264 = vstv %s244
        %v265 = vmul.f32 %v264, %v237
        %v266 = vmul.f32 %v264, %v238
        %269 = vrot.lane.b32.xlu0 %v265, 126
        %v270 = vpop.permute.xlu0 %269
        %271 = vrot.lane.b32.xlu0 %v266, 126
        %v272 = vpop.permute.xlu0 %271
        %v275 = vadd.f32 %v262, %v270
        %v276 = vadd.f32 %v263, %v272
        %v277 = vstv %s245
        %v278 = vmul.f32 %v277, %v240
        %v279 = vmul.f32 %v277, %v241
        %v280 = vsub.f32 %v275, %v278
        %v281 = vsub.f32 %v276, %v279
        %v282 = vstv %s246
        %v283 = vmul.f32 %v282, %v240
        %v284 = vmul.f32 %v282, %v241
        %287 = vrot.lane.b32.xlu0 %v283, 127
        %v288 = vpop.permute.xlu0 %287
        %289 = vrot.lane.b32.xlu0 %v284, 127
        %v290 = vpop.permute.xlu0 %289
        %v293 = vsub.f32 %v280, %v288
        %v294 = vsub.f32 %v281, %v290
        %v295 = vstv %s247
        %v296 = vmul.f32 %v295, %v240
        %v297 = vmul.f32 %v295, %v241
        %300 = vrot.lane.b32.xlu0 %v296, 126
        %v301 = vpop.permute.xlu0 %300
        %302 = vrot.lane.b32.xlu0 %v297, 126
        %v303 = vpop.permute.xlu0 %302
        %v306 = vsub.f32 %v293, %v301
        %v307 = vsub.f32 %v294, %v303
        %v308 = vmul.f32 %v277, %v237
        %v309 = vmul.f32 %v277, %v238
        %v310 = vmul.f32 %v282, %v237
        %v311 = vmul.f32 %v282, %v238
        %314 = vrot.lane.b32.xlu0 %v310, 127
        %v315 = vpop.permute.xlu0 %314
        %316 = vrot.lane.b32.xlu0 %v311, 127
        %v317 = vpop.permute.xlu0 %316
        %v320 = vadd.f32 %v308, %v315
        %v321 = vadd.f32 %v309, %v317
        %v322 = vmul.f32 %v295, %v237
        %v323 = vmul.f32 %v295, %v238
        %326 = vrot.lane.b32.xlu0 %v322, 126
        %v327 = vpop.permute.xlu0 %326
        %328 = vrot.lane.b32.xlu0 %v323, 126
        %v329 = vpop.permute.xlu0 %328
        %v332 = vadd.f32 %v320, %v327
        %v333 = vadd.f32 %v321, %v329
        %v334 = vmul.f32 %v248, %v240
        %v335 = vmul.f32 %v248, %v241
        %v336 = vadd.f32 %v332, %v334
        %v337 = vadd.f32 %v333, %v335
        %v338 = vmul.f32 %v251, %v240
        %v339 = vmul.f32 %v251, %v241
        %342 = vrot.lane.b32.xlu0 %v338, 127
        %v343 = vpop.permute.xlu0 %342
        %344 = vrot.lane.b32.xlu0 %v339, 127
        %v345 = vpop.permute.xlu0 %344
        %v348 = vadd.f32 %v336, %v343
        %v349 = vadd.f32 %v337, %v345
        %v350 = vmul.f32 %v264, %v240
        %v351 = vmul.f32 %v264, %v241
        %354 = vrot.lane.b32.xlu0 %v350, 126
        %v355 = vpop.permute.xlu0 %354
        %356 = vrot.lane.b32.xlu0 %v351, 126
        %v357 = vpop.permute.xlu0 %356
        %v360 = vadd.f32 %v348, %v355
        %v361 = vadd.f32 %v349, %v357
        %s362 = sld [smem:[#allocation4]]
        %s363 = sld [smem:[#allocation4 + $0x4]]
        %s364 = sld [smem:[#allocation4 + $0x8]]
        %s365 = sld [smem:[#allocation4 + $0x1]]
        %s366 = sld [smem:[#allocation4 + $0x5]]
        %s367 = sld [smem:[#allocation4 + $0x9]]
        %s368 = sld [smem:[#allocation4 + $0x2]]
        %s369 = sld [smem:[#allocation4 + $0x6]]
        %s370 = sld [smem:[#allocation4 + $0xa]]
        %s371 = sld [smem:[#allocation4 + $0x3]]
        %s372 = sld [smem:[#allocation4 + $0x7]]
        %s373 = sld [smem:[#allocation4 + $0xb]]
        %v374 = vstv %s362
        %v375 = vmul.f32 %v374, %v306
        %v376 = vmul.f32 %v374, %v307
        %v377 = vstv %s363
        %v378 = vmul.f32 %v377, %v360
        %v379 = vmul.f32 %v377, %v361
        %v380 = vadd.f32 %v375, %v378
        %v381 = vadd.f32 %v376, %v379
        %v382 = vstv %s364
        %v383 = vadd.f32 %v380, %v382
        %v384 = vadd.f32 %v381, %v382
        %vm385 = vcmask 113664
        %386 = vst.msk [vmem:[%s235] sm:$0xff] %vm385, %v383
        %387 = vst.msk [vmem:[%s235 + $0x8] sm:$0xff] %vm385, %v384
        %v388 = vstv %s365
        %v389 = vmul.f32 %v388, %v306
        %v390 = vmul.f32 %v388, %v307
        %v391 = vstv %s366
        %v392 = vmul.f32 %v391, %v360
        %v393 = vmul.f32 %v391, %v361
        %v394 = vadd.f32 %v389, %v392
        %v395 = vadd.f32 %v390, %v393
        %v396 = vstv %s367
        %v397 = vadd.f32 %v394, %v396
        %v398 = vadd.f32 %v395, %v396
        %s399 = scalar_lea.vmem %s235, 16
        %400 = vst.msk [vmem:[%s399] sm:$0xff] %vm385, %v397
        %401 = vst.msk [vmem:[%s399 + $0x8] sm:$0xff] %vm385, %v398
        %v402 = vstv %s368
        %v403 = vmul.f32 %v402, %v306
        %v404 = vmul.f32 %v402, %v307
        %v405 = vstv %s369
        %v406 = vmul.f32 %v405, %v360
        %v407 = vmul.f32 %v405, %v361
        %v408 = vadd.f32 %v403, %v406
        %v409 = vadd.f32 %v404, %v407
        %v410 = vstv %s370
        %v411 = vadd.f32 %v408, %v410
        %v412 = vadd.f32 %v409, %v410
        %s413 = scalar_lea.vmem %s235, 32
        %414 = vst.msk [vmem:[%s413] sm:$0xff] %vm385, %v411
        %415 = vst.msk [vmem:[%s413 + $0x8] sm:$0xff] %vm385, %v412
        %v416 = vstv %s371
        %v417 = vmul.f32 %v416, %v306
        %v418 = vmul.f32 %v416, %v307
        %v419 = vstv %s372
        %v420 = vmul.f32 %v419, %v360
        %v421 = vmul.f32 %v419, %v361
        %v422 = vadd.f32 %v417, %v420
        %v423 = vadd.f32 %v418, %v421
        %v424 = vstv %s373
        %v425 = vadd.f32 %v422, %v424
        %v426 = vadd.f32 %v423, %v424
        %s427 = scalar_lea.vmem %s235, 48
        %428 = vst.msk [vmem:[%s427] sm:$0xff] %vm385, %v425
        %429 = vst.msk [vmem:[%s427 + $0x8] sm:$0xff] %vm385, %v426
        %s430 = smul.u32 2, %s21
        %p431 = scmp.lt.s32.totalorder %s20, 1
        %s432 = scalar_select %p431, %s20, 1
        %p433 = scmp.lt.s32.totalorder %s430, 1
        %s434 = scalar_select %p433, %s430, 1
        %s435 = smul.addr %s432, 8
        %s436 = sadd.s32 %s434, %s435
        %s437 = smul.addr %s436, 8
        %s438 = scalar_lea.vmem %s3, %s437
        // Predicated region
        $region41: #{phase_encoder_v3.1} parent=31 // pred_check
          %p439 = pneg %p118
        $region42: #{phase_encoder_v3.1} parent=31 // pred_check_branch
          %441 = sbr.rel (%p439) target = $region44
        $region43: #{phase_encoder_v3.1} parent=31 // pred_region
          %s442 = smul.u32 2, %s21
        $region44: #{phase_encoder_v3.1} parent=31 // pred_fallthru
          _
      $region32: #{phase_encoder_v3.1} parent=5 // pred_fallthru
        _
      %p443 = scmp.le.s32.totalorder 2, %s11
      // Predicated region
      $region45: #{phase_encoder_v3.1} parent=5 // pred_check
        %p444 = pneg %p443
      $region46: #{phase_encoder_v3.1} parent=5 // pred_check_branch
        %446 = sbr.rel (%p444) target = $region48
      $region47: #{phase_encoder_v3.1} parent=5 // pred_region
        %s447 = ssub.s32 %s11, 2
        // Predicated region
        $region49: #{phase_encoder_v3.1} parent=47 // pred_check
          %p448 = pneg %p124
        $region50: #{phase_encoder_v3.1} parent=47 // pred_check_branch
          %450 = sbr.rel (%p448) target = $region52
        $region51: #{phase_encoder_v3.1} parent=47 // pred_region
          %s451 = smul.u32 2, %s23
          %p452 = scmp.lt.s32.totalorder %s22, 1
          %s453 = scalar_select %p452, %s22, 1
          %p454 = scmp.lt.s32.totalorder %s451, 1
          %s455 = scalar_select %p454, %s451, 1
          %s456 = smul.addr %s453, 8
          %s457 = sadd.s32 %s455, %s456
          %s458 = smul.addr %s457, 8
          %s459 = scalar_lea.vmem %s3, %s458
        $region52: #{phase_encoder_v3.1} parent=47 // pred_fallthru
          _
      $region48: #{phase_encoder_v3.1} parent=5 // pred_fallthru
        _
    $region6: #{phase_encoder_v3.1} parent=1 // loop_footer
      %s15 = sadd.s32 1, %s11
    $region7: #{phase_encoder_v3.1} parent=1 // loop_footer_branch
      %10 = sbr.rel target = $region3
    $region8: #{phase_encoder_v3.1} parent=1 // loop_exit
      _
    %460 = vsyncpa [#allocation3], 1
    %s461 = scalar_lea.sflag [#allocation3], 1
    %462 = vsyncpa %s461, 1
    %463 = vsyncpa [#allocation5], 1

</llo_original>
